<compile_context>
chip_gen: v6e
topology: v6e:2x2x1
jax: 0.10.0
libtpu: 0.0.40
codegen_flags: <defaults>
</compile_context>

<pallas_src>
import math

import jax
import jax.numpy as jnp
from jax import lax
from jax.experimental import pallas as pl
from jax.experimental.pallas import tpu as pltpu


def _lora_linear_kernel(x_ref, w_ref, b_ref, t_ref, lb_ref, o_ref, acc_ref):
    # grid = (i over M tiles, j over N tiles, k over K tiles); k is the reduction.
    k = pl.program_id(2)
    nk = pl.num_programs(2)

    # Seed the f32 accumulator with the bias tile (bias-as-init, no extra add).
    @pl.when(k == 0)
    def _():
        acc_ref[...] = jnp.broadcast_to(
            b_ref[...].astype(jnp.float32), acc_ref.shape)

    # Base matmul: contract on the K (last) dims of both tiles -> MXU directly,
    # no per-step transpose of the weight block.
    acc_ref[...] += lax.dot_general(
        x_ref[...], w_ref[...],
        dimension_numbers=(((1,), (1,)), ((), ())),
        preferred_element_type=jnp.float32)

    # Final K step: add the LoRA adapter (t already holds (x @ A^T) / rank,
    # computed once per M row in the wrapper) and store.
    @pl.when(k == nk - 1)
    def _():
        adapter = lax.dot_general(
            t_ref[...], lb_ref[...],
            dimension_numbers=(((1,), (1,)), ((), ())),
            preferred_element_type=jnp.float32)
        o_ref[...] = (acc_ref[...] + adapter).astype(o_ref.dtype)


def _round_up(x, m):
    return ((x + m - 1) // m) * m


def _pick_divisor_tile(dim, requested, granule):
    """Largest tile <= requested (multiple of granule) dividing the padded dim."""
    dim_r = _round_up(dim, granule)
    t = min(_round_up(requested, granule), dim_r)
    while dim_r % t:
        t -= granule
    return t, dim_r


def _pad2d(a, rows, cols):
    pr, pc = rows - a.shape[0], cols - a.shape[1]
    if pr == 0 and pc == 0:
        return a                      # no-op: avoid an extra HBM copy
    return jnp.pad(a, ((0, pr), (0, pc)))


def lora_linear(x, weight, bias, lora_a, lora_b, rank, *,
                tm=256, tn=256, tk=1024, compute_dtype=jnp.bfloat16):
    """LoRALinear forward: x @ W^T + bias + ((x @ A^T) @ B^T) / rank."""
    orig_shape = x.shape
    out_features, in_features = weight.shape
    assert lora_a.shape == (rank, in_features)
    assert lora_b.shape == (out_features, rank)

    out_dtype = x.dtype
    cdt = jnp.dtype(compute_dtype)
    m_gran = 16 if cdt.itemsize < 4 else 8   # bf16 needs (16, 128) min tiles

    x2d = x.reshape(-1, in_features)
    M = x2d.shape[0]

    # Hoisted LoRA-A product (tiny: M x K x r), 1/rank folded in, f32 highest.
    t = jnp.matmul(x2d.astype(jnp.float32), lora_a.astype(jnp.float32).T,
                   precision="highest") / float(rank)

    # Tile selection: clamp to problem extents; tn/tk become divisors of the
    # 128-aligned N/K extents so aligned weights need no padding copy.
    tm = min(tm, _round_up(M, m_gran))
    tm = _round_up(tm, m_gran)
    tn, Np = _pick_divisor_tile(out_features, tn, 128)
    tk, Kp = _pick_divisor_tile(in_features, tk, 128)
    Mp = _round_up(M, tm)
    Rp = _round_up(rank, 128)          # lane-dense LoRA rank (tiny arrays)

    # Zero-pad to tile boundaries (skipped when already aligned).
    xp = _pad2d(x2d.astype(cdt), Mp, Kp)
    wp = _pad2d(weight.astype(cdt), Np, Kp)
    bp = _pad2d(bias.astype(jnp.float32).reshape(1, out_features), 1, Np)
    tp = _pad2d(t.astype(cdt), Mp, Rp)
    lbp = _pad2d(lora_b.astype(cdt), Np, Rp)

    grid = (Mp // tm, Np // tn, Kp // tk)

    # VMEM budget from the actual double-buffered tiles + scratch, with
    # headroom, capped at the 32 MiB scoped default (portable to v7x).
    csz = cdt.itemsize
    osz = jnp.dtype(out_dtype).itemsize
    vmem_bytes = 2 * (tm * tk * csz + tn * tk * csz + tn * 4
                      + tm * Rp * csz + tn * Rp * csz + tm * tn * osz)
    vmem_bytes += tm * tn * 4          # f32 accumulator scratch
    vmem_limit = int(min(max(2 * vmem_bytes, 16 * 1024 * 1024),
                         32 * 1024 * 1024))

    # TODO(synk): if a profile shows exposed DMA at tiny M (decode), sweep
    # pipeline_mode=pl.Buffered(3) on the x / weight BlockSpecs.
    out = pl.pallas_call(
        _lora_linear_kernel,
        out_shape=jax.ShapeDtypeStruct((Mp, Np), out_dtype),
        grid_spec=pltpu.PrefetchScalarGridSpec(
            num_scalar_prefetch=0,
            grid=grid,
            in_specs=[
                pl.BlockSpec((tm, tk), lambda i, j, k: (i, k)),   # x
                pl.BlockSpec((tn, tk), lambda i, j, k: (j, k)),   # weight
                pl.BlockSpec((1, tn), lambda i, j, k: (0, j)),    # bias
                pl.BlockSpec((tm, Rp), lambda i, j, k: (i, 0)),   # t = (x@A^T)/r
                pl.BlockSpec((tn, Rp), lambda i, j, k: (j, 0)),   # lora_b
            ],
            out_specs=pl.BlockSpec((tm, tn), lambda i, j, k: (i, j)),
            scratch_shapes=[
                pltpu.VMEM((tm, tn), jnp.float32),   # base+bias accumulator
            ],
        ),
        compiler_params=pltpu.CompilerParams(
            # i and j are independent (LoRA-A scratch dependency removed), so
            # both can be sharded across TensorCores; k is the reduction.
            dimension_semantics=("parallel", "parallel", "arbitrary"),
            vmem_limit_bytes=vmem_limit,
        ),
    )(xp, wp, bp, tp, lbp)

    out = out[:M, :out_features]
    return out.reshape(*orig_shape[:-1], out_features)


def init_params(key, in_features, out_features, rank, dtype=jnp.float32):
    """Deterministic synthetic parameters matching LoRALinear.__init__ shapes."""
    k_w, k_b, k_a = jax.random.split(key, 3)
    weight = jax.random.normal(k_w, (out_features, in_features), dtype) * 0.02
    bias = jax.random.normal(k_b, (out_features,), dtype) * 0.01
    # reset_parameters(): lora_a ~ U(-std, std), std = gain/sqrt(in),
    # gain = calculate_gain('leaky_relu', sqrt(5)) = sqrt(1/3)
    gain = math.sqrt(2.0 / (1.0 + 5.0))
    std = gain / math.sqrt(in_features)
    lora_a = jax.random.uniform(k_a, (rank, in_features), dtype,
                                minval=-std, maxval=std)
    lora_b = jnp.zeros((out_features, rank), dtype)
    return weight, bias, lora_a, lora_b


if __name__ == "__main__":
    key = jax.random.PRNGKey(0)
    batch, seq, in_features, out_features, rank = 2, 8, 256, 384, 4

    k_x, k_p = jax.random.split(key)
    x = jax.random.normal(k_x, (batch, seq, in_features), jnp.float32)
    weight, bias, lora_a, lora_b = init_params(k_p, in_features, out_features, rank)
    # Nonzero lora_b so the adapter path is actually exercised numerically.
    lora_b = jax.random.normal(jax.random.PRNGKey(1),
                               (out_features, rank), jnp.float32) * 0.05

    # High-precision pure-JAX reference of the PyTorch forward.
    ref = (jnp.matmul(x, weight.T, precision="highest") + bias
           + jnp.matmul(jnp.matmul(x, lora_a.T, precision="highest"),
                        lora_b.T, precision="highest") / rank)

    # 1) Default production path: bf16 streams / MXU, f32 accumulation,
    #    large-tile defaults (clamped to the small problem).
    out = lora_linear(x, weight, bias, lora_a, lora_b, rank)
    out = jax.block_until_ready(out)
    assert out.shape == (batch, seq, out_features)
    assert jnp.allclose(out, ref, atol=2e-2, rtol=2e-2)

    # 2) Exact f32 path with small tiles to exercise the full (M, N, K) grid:
    #    K accumulation, bias-as-init, multi-tile M/N.
    out2 = lora_linear(x, weight, bias, lora_a, lora_b, rank,
                       tm=8, tn=128, tk=128, compute_dtype=jnp.float32)
    out2 = jax.block_until_ready(out2)
    assert jnp.allclose(out2, ref, atol=1e-4, rtol=1e-4)

    print("KERNEL_OK")
</pallas_src>

<mosaic_0001>
module attributes {stable_mosaic.version = 11 : i64} {
  func.func @_lora_linear_kernel(%arg0: i32, %arg1: i32, %arg2: i32, %arg3: memref<16x256xbf16, #tpu.memory_space<vmem>>, %arg4: memref<128x256xbf16, #tpu.memory_space<vmem>>, %arg5: memref<1x128xf32, #tpu.memory_space<vmem>>, %arg6: memref<16x128xbf16, #tpu.memory_space<vmem>>, %arg7: memref<128x128xbf16, #tpu.memory_space<vmem>>, %arg8: memref<16x128xf32, #tpu.memory_space<vmem>>, %arg9: memref<16x128xf32, #tpu.memory_space<vmem>>) attributes {dimension_semantics = [#tpu.dimension_semantics<parallel>, #tpu.dimension_semantics<parallel>, #tpu.dimension_semantics<arbitrary>], iteration_bounds = array<i64: 1, 3, 1>, scalar_prefetch = 0 : i64, scratch_operands = 1 : i64, tpu.core_type = #tpu.core_type<tc>, window_params = [{transform_indices = @transform_0, window_bounds = array<i64: 16, 256>}, {transform_indices = @transform_1, window_bounds = array<i64: 128, 256>}, {transform_indices = @transform_2, window_bounds = array<i64: 1, 128>}, {transform_indices = @transform_3, window_bounds = array<i64: 16, 128>}, {transform_indices = @transform_4, window_bounds = array<i64: 128, 128>}, {transform_indices = @transform_5, window_bounds = array<i64: 16, 128>}]} {
    %c0_i32 = arith.constant 0 : i32
    %0 = arith.cmpi eq, %arg2, %c0_i32 : i32
    %1 = arith.extui %0 : i1 to i32
    %c0_i32_0 = arith.constant 0 : i32
    %2 = arith.cmpi ne, %1, %c0_i32_0 : i32
    scf.if %2 {
      %c0_10 = arith.constant 0 : index
      %c0_11 = arith.constant 0 : index
      %12 = vector.load %arg5[%c0_10, %c0_11] : memref<1x128xf32, #tpu.memory_space<vmem>>, vector<1x128xf32>
      %13 = vector.shape_cast %12 : vector<1x128xf32> to vector<1x128xf32>
      %14 = vector.broadcast %13 : vector<1x128xf32> to vector<16x128xf32>
      %c0_12 = arith.constant 0 : index
      %c0_13 = arith.constant 0 : index
      %15 = vector.load %arg9[%c0_12, %c0_13] : memref<16x128xf32, #tpu.memory_space<vmem>>, vector<16x128xf32>
      tpu.vector_store %arg9[%c0_12, %c0_13], %14 {strides = array<i32>} : memref<16x128xf32, #tpu.memory_space<vmem>>, vector<16x128xf32>,
    } else {
    }
    %c0 = arith.constant 0 : index
    %c0_1 = arith.constant 0 : index
    %3 = vector.load %arg9[%c0, %c0_1] : memref<16x128xf32, #tpu.memory_space<vmem>>, vector<16x128xf32>
    %c0_2 = arith.constant 0 : index
    %c0_3 = arith.constant 0 : index
    %4 = vector.load %arg3[%c0_2, %c0_3] : memref<16x256xbf16, #tpu.memory_space<vmem>>, vector<16x256xbf16>
    %c0_4 = arith.constant 0 : index
    %c0_5 = arith.constant 0 : index
    %5 = vector.load %arg4[%c0_4, %c0_5] : memref<128x256xbf16, #tpu.memory_space<vmem>>, vector<128x256xbf16>
    %cst = arith.constant dense<0.000000e+00> : vector<16x128xf32>
    %6 = tpu.matmul %4, %5, %cst {dimension_numbers = #tpu.dot_dimension_numbers<[1], [1], [0], [0], [0, 0, 1, 0], [], []>} : vector<16x256xbf16>, vector<128x256xbf16>, vector<16x128xf32> -> vector<16x128xf32>
    %7 = arith.addf %3, %6 : vector<16x128xf32>
    %c0_6 = arith.constant 0 : index
    %c0_7 = arith.constant 0 : index
    %8 = vector.load %arg9[%c0_6, %c0_7] : memref<16x128xf32, #tpu.memory_space<vmem>>, vector<16x128xf32>
    tpu.vector_store %arg9[%c0_6, %c0_7], %7 {strides = array<i32>} : memref<16x128xf32, #tpu.memory_space<vmem>>, vector<16x128xf32>,
    %c0_i32_8 = arith.constant 0 : i32
    %9 = arith.cmpi eq, %arg2, %c0_i32_8 : i32
    %10 = arith.extui %9 : i1 to i32
    %c0_i32_9 = arith.constant 0 : i32
    %11 = arith.cmpi ne, %10, %c0_i32_9 : i32
    scf.if %11 {
      %c0_10 = arith.constant 0 : index
      %c0_11 = arith.constant 0 : index
      %12 = vector.load %arg6[%c0_10, %c0_11] : memref<16x128xbf16, #tpu.memory_space<vmem>>, vector<16x128xbf16>
      %c0_12 = arith.constant 0 : index
      %c0_13 = arith.constant 0 : index
      %13 = vector.load %arg7[%c0_12, %c0_13] : memref<128x128xbf16, #tpu.memory_space<vmem>>, vector<128x128xbf16>
      %cst_14 = arith.constant dense<0.000000e+00> : vector<16x128xf32>
      %14 = tpu.matmul %12, %13, %cst_14 {dimension_numbers = #tpu.dot_dimension_numbers<[1], [1], [0], [0], [0, 0, 1, 0], [], []>} : vector<16x128xbf16>, vector<128x128xbf16>, vector<16x128xf32> -> vector<16x128xf32>
      %c0_15 = arith.constant 0 : index
      %c0_16 = arith.constant 0 : index
      %15 = vector.load %arg9[%c0_15, %c0_16] : memref<16x128xf32, #tpu.memory_space<vmem>>, vector<16x128xf32>
      %16 = arith.addf %15, %14 : vector<16x128xf32>
      %c0_17 = arith.constant 0 : index
      %c0_18 = arith.constant 0 : index
      %17 = vector.load %arg8[%c0_17, %c0_18] : memref<16x128xf32, #tpu.memory_space<vmem>>, vector<16x128xf32>
      tpu.vector_store %arg8[%c0_17, %c0_18], %16 {strides = array<i32>} : memref<16x128xf32, #tpu.memory_space<vmem>>, vector<16x128xf32>,
    } else {
    }
    return
  }
  func.func @transform_0(%arg0: i32, %arg1: i32, %arg2: i32) -> (i32, i32) {
    %c0_i32 = arith.constant 0 : i32
    return %arg0, %arg2 : i32, i32
  }
  func.func @transform_1(%arg0: i32, %arg1: i32, %arg2: i32) -> (i32, i32) {
    %c0_i32 = arith.constant 0 : i32
    return %arg1, %arg2 : i32, i32
  }
  func.func @transform_2(%arg0: i32, %arg1: i32, %arg2: i32) -> (i32, i32) {
    %c0_i32 = arith.constant 0 : i32
    %c0_i32_0 = arith.constant 0 : i32
    return %c0_i32, %arg1 : i32, i32
  }
  func.func @transform_3(%arg0: i32, %arg1: i32, %arg2: i32) -> (i32, i32) {
    %c0_i32 = arith.constant 0 : i32
    %c0_i32_0 = arith.constant 0 : i32
    return %arg0, %c0_i32 : i32, i32
  }
  func.func @transform_4(%arg0: i32, %arg1: i32, %arg2: i32) -> (i32, i32) {
    %c0_i32 = arith.constant 0 : i32
    %c0_i32_0 = arith.constant 0 : i32
    return %arg1, %c0_i32 : i32, i32
  }
  func.func @transform_5(%arg0: i32, %arg1: i32, %arg2: i32) -> (i32, i32) {
    %c0_i32 = arith.constant 0 : i32
    return %arg0, %arg1 : i32, i32
  }
}

</mosaic_0001>

<llo_original>
// kernel: tpu_custom_call.1
$region0: #{tpu_custom_call.1}
  #allocation0 [shape = 'u32[]', space=smem, size = 0x4, offset = 0x4, fixed_abs, tag = 'smem constant byte address 0x4 - core index']
  #allocation1 [shape = 'u32[144,128]{1,0:T(1,128)}', space=vmem, size = 0x12000, scoped, tag = 'internal scratch']
  #allocation2 [shape = 'f32[16,128]{1,0:T(8,128)}', space=vmem, size = 0x2000, scoped, tag = 'scratch operand']
  %s0 = inlined_call_operand.hbm [shape: bf16[16,256], index: 0, kind: input, shape index: {}]
  %s1 = inlined_call_operand.hbm [shape: bf16[384,256], index: 1, kind: input, shape index: {}]
  %s2 = inlined_call_operand.vmem [shape: f32[1,384], index: 2, kind: input, shape index: {}]
  %s3 = inlined_call_operand.hbm [shape: bf16[16,128], index: 3, kind: input, shape index: {}]
  %s4 = inlined_call_operand.hbm [shape: bf16[384,128], index: 4, kind: input, shape index: {}]
  %s5 = inlined_call_operand.hbm [shape: f32[16,384], index: 5, kind: output, shape index: {}]
  %s6 = sld [smem:[#allocation0]]
  $region77: #{tpu_custom_call.1} parent=0
    _
  %s8 = ssub.s32 1, %s6
  %s9 = scalar_select 0, %s8, %s6
  $region1: #{tpu_custom_call.1} parent=0
    #allocation3 [shape = 'u8[8192]{0}', space=vmem, size = 0x2000, scoped, tag = 'input window, operand 0, single buffered']
    #allocation4 [shape = 's32[2]{0}', space=sflag, size = 0x8, scoped, tag = 'scoped memory for tpu_custom_call.1']
    #allocation5 [shape = 's32[2]{0}', space=sflag, size = 0x8, scoped, tag = 'scoped memory for tpu_custom_call.1']
    #allocation6 [shape = 'u8[131072]{0}', space=vmem, size = 0x20000, scoped, tag = 'input window, operand 1']
    #allocation7 [shape = 's32[2]{0}', space=sflag, size = 0x8, scoped, tag = 'scoped memory for tpu_custom_call.1']
    #allocation8 [shape = 'u8[4096]{0}', space=vmem, size = 0x1000, scoped, tag = 'input window, operand 3, single buffered']
    #allocation9 [shape = 'u8[65536]{0}', space=vmem, size = 0x10000, scoped, tag = 'input window, operand 4']
    #allocation10 [shape = 's32[2]{0}', space=sflag, size = 0x8, scoped, tag = 'scoped memory for tpu_custom_call.1']
    #allocation11 [shape = 'u8[16384]{0}', space=vmem, size = 0x4000, scoped, tag = 'output window, operand 0']
    %10 = vsyncpa [#allocation4], 0
    %11 = vsyncpa [#allocation7], 0
    %s12 = scalar_lea.sflag [#allocation7], 1
    %13 = vsyncpa %s12, 0
    %14 = vsyncpa [#allocation10], 0
    %s15 = scalar_lea.sflag [#allocation10], 1
    %16 = vsyncpa %s15, 0
    %17 = vsyncpa [#allocation5], 0
    %s18 = scalar_lea.sflag [#allocation5], 1
    %19 = vsyncpa %s18, 0
    loop: start=0, step=1, limit=5
    $region2: #{tpu_custom_call.1} parent=1 // loop_pre_header
      _
    $region3: #{tpu_custom_call.1} parent=1 // loop_header
      %s21 = sphi 0, %s25
      %p22 = scmp.ge.s32.totalorder %s21, 5
      %s28 = sphi 0, %s47
      %s29 = sphi 0, %s43
      %s30 = sphi 0, %s39
      %s31 = sphi 0, %s28
      %s32 = sphi 0, %s29
      %s33 = sphi 0, %s30
      %s34 = sphi 0, %s31
      %s35 = sphi 0, %s32
      %s36 = sphi 0, %s33
      %s52 = sphi 0, %s54
      %s55 = sphi 0, %s52
      %s56 = sphi 0, %s55
      %s72 = sphi 0, %s56
      %s80 = sphi 0, %s82
      %s83 = sphi 0, %s80
      %s84 = sphi 0, %s83
      %s100 = sphi 0, %s84
      %s106 = sphi 0, %s108
      %s109 = sphi 0, %s106
      %s110 = sphi 0, %s109
      %s126 = sphi 0, %s110
      %s132 = sphi 0, %s134
      %s135 = sphi 0, %s132
      %s136 = sphi 0, %s135
      %s152 = sphi 0, %s136
      %s158 = sphi 0, %s160
      %s161 = sphi 0, %s158
      %s162 = sphi 0, %s161
      %s178 = sphi 0, %s162
      %s186 = sphi 0, %s188
      %s189 = sphi 0, %s186
      %s190 = sphi 0, %s189
      %s206 = sphi 0, %s190
    $region4: #{tpu_custom_call.1} parent=1 // loop_header_branch
      %24 = sbr.rel (%p22) target = $region8
    $region5: #{tpu_custom_call.1} parent=1 // loop_body
      %s26 = ssub.s32 %s21, 1
      %s27 = ssub.s32 %s21, 2
      %s37 = sadd.s32 1, %s30
      %p38 = scmp.ge.s32.totalorder %s37, 1
      %s39 = scalar_select %p38, 0, %s37
      %s40 = sadd.s32 1, %s29
      %s41 = scalar_select %p38, %s40, %s29
      %p42 = scmp.ge.s32.totalorder %s41, 3
      %s43 = scalar_select %p42, 0, %s41
      %s44 = sadd.s32 1, %s28
      %s45 = scalar_select %p42, %s44, %s28
      %p46 = scmp.ge.s32.totalorder %s45, 1
      %s47 = scalar_select %p46, 0, %s45
      %s48 = ssub.s32 %s28, %s47
      %s49 = ssub.s32 %s30, %s39
      %s50 = sor.u32 %s48, %s49
      %p51 = scmp.eq.s32.totalorder %s50, 0
      %s53 = sadd.s32 %s52, 1
      %s54 = scalar_select %p51, %s52, %s53
      %p57 = pneg %p51
      %p58 = scmp.eq.s32.totalorder %s21, 2
      %p59 = por %p57, %p58
      %p60 = scmp.ne.s32.totalorder %s52, %s55
      %p61 = scmp.eq.s32.totalorder %s21, 0
      %p62 = por %p60, %p61
      %p63 = scmp.ne.s32.totalorder %s52, %s55
      %p64 = scmp.eq.s32.totalorder %s26, 2
      %p65 = por %p63, %p64
      %p66 = scmp.ne.s32.totalorder %s55, %s56
      %p67 = scmp.eq.s32.totalorder %s26, 0
      %p68 = por %p66, %p67
      %p69 = scmp.ne.s32.totalorder %s55, %s56
      %p70 = scmp.eq.s32.totalorder %s27, 2
      %p71 = por %p69, %p70
      %p73 = scmp.ne.s32.totalorder %s56, %s72
      %p74 = scmp.eq.s32.totalorder %s27, 0
      %p75 = por %p73, %p74
      %s76 = ssub.s32 %s29, %s43
      %s77 = ssub.s32 %s30, %s39
      %s78 = sor.u32 %s76, %s77
      %p79 = scmp.eq.s32.totalorder %s78, 0
      %s81 = sadd.s32 %s80, 1
      %s82 = scalar_select %p79, %s80, %s81
      %p85 = pneg %p79
      %p86 = scmp.eq.s32.totalorder %s21, 2
      %p87 = por %p85, %p86
      %p88 = scmp.ne.s32.totalorder %s80, %s83
      %p89 = scmp.eq.s32.totalorder %s21, 0
      %p90 = por %p88, %p89
      %p91 = scmp.ne.s32.totalorder %s80, %s83
      %p92 = scmp.eq.s32.totalorder %s26, 2
      %p93 = por %p91, %p92
      %p94 = scmp.ne.s32.totalorder %s83, %s84
      %p95 = scmp.eq.s32.totalorder %s26, 0
      %p96 = por %p94, %p95
      %p97 = scmp.ne.s32.totalorder %s83, %s84
      %p98 = scmp.eq.s32.totalorder %s27, 2
      %p99 = por %p97, %p98
      %p101 = scmp.ne.s32.totalorder %s84, %s100
      %p102 = scmp.eq.s32.totalorder %s27, 0
      %p103 = por %p101, %p102
      %s104 = ssub.s32 %s29, %s43
      %p105 = scmp.eq.s32.totalorder %s104, 0
      %s107 = sadd.s32 %s106, 1
      %s108 = scalar_select %p105, %s106, %s107
      %p111 = pneg %p105
      %p112 = scmp.eq.s32.totalorder %s21, 2
      %p113 = por %p111, %p112
      %p114 = scmp.ne.s32.totalorder %s106, %s109
      %p115 = scmp.eq.s32.totalorder %s21, 0
      %p116 = por %p114, %p115
      %p117 = scmp.ne.s32.totalorder %s106, %s109
      %p118 = scmp.eq.s32.totalorder %s26, 2
      %p119 = por %p117, %p118
      %p120 = scmp.ne.s32.totalorder %s109, %s110
      %p121 = scmp.eq.s32.totalorder %s26, 0
      %p122 = por %p120, %p121
      %p123 = scmp.ne.s32.totalorder %s109, %s110
      %p124 = scmp.eq.s32.totalorder %s27, 2
      %p125 = por %p123, %p124
      %p127 = scmp.ne.s32.totalorder %s110, %s126
      %p128 = scmp.eq.s32.totalorder %s27, 0
      %p129 = por %p127, %p128
      %s130 = ssub.s32 %s28, %s47
      %p131 = scmp.eq.s32.totalorder %s130, 0
      %s133 = sadd.s32 %s132, 1
      %s134 = scalar_select %p131, %s132, %s133
      %p137 = pneg %p131
      %p138 = scmp.eq.s32.totalorder %s21, 2
      %p139 = por %p137, %p138
      %p140 = scmp.ne.s32.totalorder %s132, %s135
      %p141 = scmp.eq.s32.totalorder %s21, 0
      %p142 = por %p140, %p141
      %p143 = scmp.ne.s32.totalorder %s132, %s135
      %p144 = scmp.eq.s32.totalorder %s26, 2
      %p145 = por %p143, %p144
      %p146 = scmp.ne.s32.totalorder %s135, %s136
      %p147 = scmp.eq.s32.totalorder %s26, 0
      %p148 = por %p146, %p147
      %p149 = scmp.ne.s32.totalorder %s135, %s136
      %p150 = scmp.eq.s32.totalorder %s27, 2
      %p151 = por %p149, %p150
      %p153 = scmp.ne.s32.totalorder %s136, %s152
      %p154 = scmp.eq.s32.totalorder %s27, 0
      %p155 = por %p153, %p154
      %s156 = ssub.s32 %s29, %s43
      %p157 = scmp.eq.s32.totalorder %s156, 0
      %s159 = sadd.s32 %s158, 1
      %s160 = scalar_select %p157, %s158, %s159
      %p163 = pneg %p157
      %p164 = scmp.eq.s32.totalorder %s21, 2
      %p165 = por %p163, %p164
      %p166 = scmp.ne.s32.totalorder %s158, %s161
      %p167 = scmp.eq.s32.totalorder %s21, 0
      %p168 = por %p166, %p167
      %p169 = scmp.ne.s32.totalorder %s158, %s161
      %p170 = scmp.eq.s32.totalorder %s26, 2
      %p171 = por %p169, %p170
      %p172 = scmp.ne.s32.totalorder %s161, %s162
      %p173 = scmp.eq.s32.totalorder %s26, 0
      %p174 = por %p172, %p173
      %p175 = scmp.ne.s32.totalorder %s161, %s162
      %p176 = scmp.eq.s32.totalorder %s27, 2
      %p177 = por %p175, %p176
      %p179 = scmp.ne.s32.totalorder %s162, %s178
      %p180 = scmp.eq.s32.totalorder %s27, 0
      %p181 = por %p179, %p180
      %s182 = ssub.s32 %s28, %s47
      %s183 = ssub.s32 %s29, %s43
      %s184 = sor.u32 %s182, %s183
      %p185 = scmp.eq.s32.totalorder %s184, 0
      %s187 = sadd.s32 %s186, 1
      %s188 = scalar_select %p185, %s186, %s187
      %p191 = pneg %p185
      %p192 = scmp.eq.s32.totalorder %s21, 2
      %p193 = por %p191, %p192
      %p194 = scmp.ne.s32.totalorder %s186, %s189
      %p195 = scmp.eq.s32.totalorder %s21, 0
      %p196 = por %p194, %p195
      %p197 = scmp.ne.s32.totalorder %s186, %s189
      %p198 = scmp.eq.s32.totalorder %s26, 2
      %p199 = por %p197, %p198
      %p200 = scmp.ne.s32.totalorder %s189, %s190
      %p201 = scmp.eq.s32.totalorder %s26, 0
      %p202 = por %p200, %p201
      %p203 = scmp.ne.s32.totalorder %s189, %s190
      %p204 = scmp.eq.s32.totalorder %s27, 2
      %p205 = por %p203, %p204
      %p207 = scmp.ne.s32.totalorder %s190, %s206
      %p208 = scmp.eq.s32.totalorder %s27, 0
      %p209 = por %p207, %p208
      %p210 = scmp.le.s32.totalorder 1, %s21
      %p211 = scmp.lt.s32.totalorder %s21, 4
      %p212 = pnand %p210, %p211
      %p213 = pneg %p212
      // Predicated region
      $region9: #{tpu_custom_call.1} parent=5 // pred_check
        _
      $region10: #{tpu_custom_call.1} parent=5 // pred_check_branch
        %215 = sbr.rel (%p212) target = $region12
      $region11: #{tpu_custom_call.1} parent=5 // pred_region
        %s216 = ssub.s32 %s21, 1
        // Predicated region
        $region13: #{tpu_custom_call.1} parent=11 // pred_check
          %p217 = pneg %p68
        $region14: #{tpu_custom_call.1} parent=11 // pred_check_branch
          %219 = sbr.rel (%p217) target = $region16
        $region15: #{tpu_custom_call.1} parent=11 // pred_region
          %s220 = smul.u32 2, %s31
          %s221 = smul.u32 2, %s33
          %s223 = ssub.s32 256, 256
          %224 = vsyncadd [#allocation4], %s223
          %s225 = smul.addr %s220, 2
          %s226 = sadd.s32 %s221, %s225
          %s227 = smul.addr %s226, 64
          %s228 = scalar_lea.hbm %s0, %s227
          %s229 = sshll.u32 [#allocation3], 4
          %s230 = int_to_ptr.vmem [resolvable:$true] %s229
          %235 = dma.hbm_to_vmem [thread:$0]  %s228, 256, %s230, [#allocation4], 128, 128, 8
        $region16: #{tpu_custom_call.1} parent=11 // pred_fallthru
          _
        // Predicated region
        $region17: #{tpu_custom_call.1} parent=11 // pred_check
          %p236 = pneg %p148
        $region18: #{tpu_custom_call.1} parent=11 // pred_check_branch
          %238 = sbr.rel (%p236) target = $region20
        $region19: #{tpu_custom_call.1} parent=11 // pred_region
          %s239 = smul.u32 2, %s31
          %s241 = ssub.s32 128, 128
          %242 = vsyncadd [#allocation7], %s241
          %s243 = smul.addr %s239, 64
          %s244 = scalar_lea.hbm %s3, %s243
          %s245 = sshll.u32 [#allocation8], 4
          %s246 = int_to_ptr.vmem [resolvable:$true] %s245
          %251 = dma.hbm_to_vmem [thread:$0]  %s244, 128, %s246, [#allocation7], 64, 64, 4
        $region20: #{tpu_custom_call.1} parent=11 // pred_fallthru
          _
      $region12: #{tpu_custom_call.1} parent=5 // pred_fallthru
        _
      %p252 = scmp.lt.s32.totalorder %s21, 3
      // Predicated region
      $region21: #{tpu_custom_call.1} parent=5 // pred_check
        %p253 = pneg %p252
      $region22: #{tpu_custom_call.1} parent=5 // pred_check_branch
        %255 = sbr.rel (%p253) target = $region24
      $region23: #{tpu_custom_call.1} parent=5 // pred_region
        // Predicated region
        $region25: #{tpu_custom_call.1} parent=23 // pred_check
          %p256 = pneg %p90
        $region26: #{tpu_custom_call.1} parent=23 // pred_check_branch
          %258 = sbr.rel (%p256) target = $region28
        $region27: #{tpu_custom_call.1} parent=23 // pred_region
          %s259 = sand.u32 %s21, 1
          %s260 = scalar_lea.sflag [#allocation7], %s259
          %s261 = sand.u32 %s80, 1
          %s262 = smul.addr %s261, 128
          %s263 = scalar_lea.vmem [#allocation6], %s262
          %s264 = smul.u32 16, %s29
          %s265 = smul.u32 2, %s30
          %s267 = ssub.s32 2048, 2048
          %268 = vsyncadd %s260, %s267
          %s269 = smul.addr %s264, 2
          %s270 = sadd.s32 %s265, %s269
          %s271 = smul.addr %s270, 64
          %s272 = scalar_lea.hbm %s1, %s271
          %s273 = sshll.u32 %s263, 4
          %s274 = int_to_ptr.vmem [resolvable:$true] %s273
          %279 = dma.hbm_to_vmem [thread:$0]  %s272, 2048, %s274, %s260, 128, 128, 8
        $region28: #{tpu_custom_call.1} parent=23 // pred_fallthru
          _
        // Predicated region
        $region29: #{tpu_custom_call.1} parent=23 // pred_check
          %p280 = pneg %p116
        $region30: #{tpu_custom_call.1} parent=23 // pred_check_branch
          %282 = sbr.rel (%p280) target = $region32
        $region31: #{tpu_custom_call.1} parent=23 // pred_region
          %p283 = scmp.lt.s32.totalorder %s29, 2
          %s284 = scalar_select %p283, %s29, 2
          %s285 = scalar_lea.vmem %s2, %s284
        $region32: #{tpu_custom_call.1} parent=23 // pred_fallthru
          _
        // Predicated region
        $region33: #{tpu_custom_call.1} parent=23 // pred_check
          %p286 = pneg %p168
        $region34: #{tpu_custom_call.1} parent=23 // pred_check_branch
          %288 = sbr.rel (%p286) target = $region36
        $region35: #{tpu_custom_call.1} parent=23 // pred_region
          %s289 = sand.u32 %s158, 1
          %s290 = scalar_lea.sflag [#allocation10], %s289
          %s291 = sand.u32 %s158, 1
          %s292 = smul.addr %s291, 64
          %s293 = scalar_lea.vmem [#allocation9], %s292
          %s294 = smul.u32 16, %s29
          %s296 = ssub.s32 1024, 1024
          %297 = vsyncadd %s290, %s296
          %s298 = smul.addr %s294, 64
          %s299 = scalar_lea.hbm %s4, %s298
          %s300 = sshll.u32 %s293, 4
          %s301 = int_to_ptr.vmem [resolvable:$true] %s300
          %306 = dma.hbm_to_vmem [thread:$0]  %s299, 1024, %s301, %s290, 64, 64, 4
        $region36: #{tpu_custom_call.1} parent=23 // pred_fallthru
          _
      $region24: #{tpu_custom_call.1} parent=5 // pred_fallthru
        _
      %p307 = scmp.le.s32.totalorder 1, %s21
      %p308 = scmp.lt.s32.totalorder %s21, 4
      %p309 = pnand %p307, %p308
      %p310 = pneg %p309
      // Predicated region
      $region37: #{tpu_custom_call.1} parent=5 // pred_check
        _
      $region38: #{tpu_custom_call.1} parent=5 // pred_check_branch
        %312 = sbr.rel (%p309) target = $region40
      $region39: #{tpu_custom_call.1} parent=5 // pred_region
        %s313 = ssub.s32 %s21, 1
        // Predicated region
        $region41: #{tpu_custom_call.1} parent=39 // pred_check
          %p314 = pneg %p68
        $region42: #{tpu_custom_call.1} parent=39 // pred_check_branch
          %316 = sbr.rel (%p314) target = $region44
        $region43: #{tpu_custom_call.1} parent=39 // pred_region
          %317 = dma.done [#allocation4], 256
        $region44: #{tpu_custom_call.1} parent=39 // pred_fallthru
          _
        %s318 = sand.u32 %s26, 1
        %s319 = scalar_lea.sflag [#allocation7], %s318
        %s320 = sand.u32 %s83, 1
        %s321 = smul.addr %s320, 128
        %s322 = scalar_lea.vmem [#allocation6], %s321
        // Predicated region
        $region45: #{tpu_custom_call.1} parent=39 // pred_check
          %p323 = pneg %p96
        $region46: #{tpu_custom_call.1} parent=39 // pred_check_branch
          %325 = sbr.rel (%p323) target = $region48
        $region47: #{tpu_custom_call.1} parent=39 // pred_region
          %326 = dma.done %s319, 2048
        $region48: #{tpu_custom_call.1} parent=39 // pred_fallthru
          _
        // Predicated region
        $region49: #{tpu_custom_call.1} parent=39 // pred_check
          %p327 = pneg %p148
        $region50: #{tpu_custom_call.1} parent=39 // pred_check_branch
          %329 = sbr.rel (%p327) target = $region52
        $region51: #{tpu_custom_call.1} parent=39 // pred_region
          %330 = dma.done [#allocation7], 128
        $region52: #{tpu_custom_call.1} parent=39 // pred_fallthru
          _
        %s331 = sand.u32 %s161, 1
        %s332 = scalar_lea.sflag [#allocation10], %s331
        %s333 = sand.u32 %s161, 1
        %s334 = smul.addr %s333, 64
        %s335 = scalar_lea.vmem [#allocation9], %s334
        // Predicated region
        $region53: #{tpu_custom_call.1} parent=39 // pred_check
          %p336 = pneg %p174
        $region54: #{tpu_custom_call.1} parent=39 // pred_check_branch
          %338 = sbr.rel (%p336) target = $region56
        $region55: #{tpu_custom_call.1} parent=39 // pred_region
          %339 = dma.done %s332, 1024
        $region56: #{tpu_custom_call.1} parent=39 // pred_fallthru
          _
        %p340 = pneg %p68
        %p341 = pneg %p65
        %s342 = sand.u32 %s26, 1
        %s343 = scalar_lea.sflag [#allocation7], %s342
        %s344 = sand.u32 %s83, 1
        %s345 = smul.addr %s344, 128
        %s346 = scalar_lea.vmem [#allocation6], %s345
        %p347 = pneg %p96
        %p348 = pneg %p93
        %p349 = scmp.lt.s32.totalorder %s32, 2
        %s350 = scalar_select %p349, %s32, 2
        %s351 = scalar_lea.vmem %s2, %s350
        %p352 = pneg %p122
        %p353 = pneg %p119
        %p354 = pneg %p148
        %p355 = pneg %p145
        %s356 = sand.u32 %s161, 1
        %s357 = scalar_lea.sflag [#allocation10], %s356
        %s358 = sand.u32 %s161, 1
        %s359 = smul.addr %s358, 64
        %s360 = scalar_lea.vmem [#allocation9], %s359
        %p361 = pneg %p174
        %p362 = pneg %p171
        %p363 = pneg %p202
        %p364 = pneg %p199
        %s365 = sand.u32 %s189, 1
        %s366 = scalar_lea.sflag [#allocation5], %s365
        %s367 = sand.u32 %s189, 1
        %s368 = smul.addr %s367, 16
        %s369 = scalar_lea.vmem [#allocation11], %s368
        %s370 = smul.u32 2, %s31
        %s371 = smul.u32 2, %s33
        %s372 = smul.u32 16, %s32
        %s373 = smul.u32 2, %s33
        %p374 = scmp.lt.s32.totalorder %s32, 2
        %s375 = scalar_select %p374, %s32, 2
        %s376 = scalar_lea.vmem %s2, %s375
        %s377 = smul.u32 2, %s31
        %s378 = smul.u32 16, %s32
        %s379 = smul.u32 2, %s31
        %p381 = scmp.eq.s32.totalorder %s33, 0
        // Predicated region
        $region57: #{tpu_custom_call.1} parent=39 // pred_check
          %p382 = pneg %p381
        $region58: #{tpu_custom_call.1} parent=39 // pred_check_branch
          %384 = sbr.rel (%p382) target = $region60
        $region59: #{tpu_custom_call.1} parent=39 // pred_region
          %v385 = vld [vmem:[%s376] sm:$0x1]
          %v387 = vlaneseq
          %v388 = vshrl.u32 %v387, 7
          %v389 = vsub.s32 0, %v388
          %v390 = vrot.slane %v385, %v389
          %392 = vst [vmem:[#allocation2] sm:$0xff] %v390
          %393 = vst [vmem:[#allocation2 + $0x8] sm:$0xff] %v390
        $region60: #{tpu_custom_call.1} parent=39 // pred_fallthru
          _
        %v394 = vld [vmem:[#allocation2] sm:$0xff]
        %v395 = vld [vmem:[#allocation2 + $0x8] sm:$0xff]
        %v396 = vld [vmem:[#allocation3] sm:$0xff]
        %v397 = vld [vmem:[#allocation3 + $0x8] sm:$0xff]
        %v398 = vld [vmem:[%s322] sm:$0xff]
        %v399 = vld [vmem:[%s322 + $0x8] sm:$0xff]
        %v400 = vld [vmem:[%s322 + $0x10] sm:$0xff]
        %v401 = vld [vmem:[%s322 + $0x18] sm:$0xff]
        %v402 = vld [vmem:[%s322 + $0x20] sm:$0xff]
        %v403 = vld [vmem:[%s322 + $0x28] sm:$0xff]
        %v404 = vld [vmem:[%s322 + $0x30] sm:$0xff]
        %v405 = vld [vmem:[%s322 + $0x38] sm:$0xff]
        %v406 = vld [vmem:[%s322 + $0x40] sm:$0xff]
        %v407 = vld [vmem:[%s322 + $0x48] sm:$0xff]
        %v408 = vld [vmem:[%s322 + $0x50] sm:$0xff]
        %v409 = vld [vmem:[%s322 + $0x58] sm:$0xff]
        %v410 = vld [vmem:[%s322 + $0x60] sm:$0xff]
        %v411 = vld [vmem:[%s322 + $0x68] sm:$0xff]
        %v412 = vld [vmem:[%s322 + $0x70] sm:$0xff]
        %v413 = vld [vmem:[%s322 + $0x78] sm:$0xff]
        %v416 = vunpack.c.l.b16 %v396
        %v417 = vunpack.c.h.b16 %v396
        %v418 = vunpack.c.l.b16 %v397
        %v419 = vunpack.c.h.b16 %v397
        %v420 = vpack.c.b16 %v418, %v416
        %v421 = vpack.c.b16 %v419, %v417
        %v440 = vunpack.c.l.b16 %v398
        %v441 = vunpack.c.h.b16 %v398
        %v442 = vunpack.c.l.b16 %v399
        %v443 = vunpack.c.h.b16 %v399
        %v444 = vunpack.c.l.b16 %v400
        %v445 = vunpack.c.h.b16 %v400
        %v446 = vunpack.c.l.b16 %v401
        %v447 = vunpack.c.h.b16 %v401
        %v448 = vunpack.c.l.b16 %v402
        %v449 = vunpack.c.h.b16 %v402
        %v450 = vunpack.c.l.b16 %v403
        %v451 = vunpack.c.h.b16 %v403
        %v452 = vunpack.c.l.b16 %v404
        %v453 = vunpack.c.h.b16 %v404
        %v454 = vunpack.c.l.b16 %v405
        %v455 = vunpack.c.h.b16 %v405
        %v456 = vunpack.c.l.b16 %v406
        %v457 = vunpack.c.h.b16 %v406
        %v458 = vunpack.c.l.b16 %v407
        %v459 = vunpack.c.h.b16 %v407
        %v460 = vunpack.c.l.b16 %v408
        %v461 = vunpack.c.h.b16 %v408
        %v462 = vunpack.c.l.b16 %v409
        %v463 = vunpack.c.h.b16 %v409
        %v464 = vunpack.c.l.b16 %v410
        %v465 = vunpack.c.h.b16 %v410
        %v466 = vunpack.c.l.b16 %v411
        %v467 = vunpack.c.h.b16 %v411
        %v468 = vunpack.c.l.b16 %v412
        %v469 = vunpack.c.h.b16 %v412
        %v470 = vunpack.c.l.b16 %v413
        %v471 = vunpack.c.h.b16 %v413
        %v472 = vpack.c.b16 %v442, %v440
        %v473 = vpack.c.b16 %v443, %v441
        %v474 = vpack.c.b16 %v446, %v444
        %v475 = vpack.c.b16 %v447, %v445
        %v476 = vpack.c.b16 %v450, %v448
        %v477 = vpack.c.b16 %v451, %v449
        %v478 = vpack.c.b16 %v454, %v452
        %v479 = vpack.c.b16 %v455, %v453
        %v480 = vpack.c.b16 %v458, %v456
        %v481 = vpack.c.b16 %v459, %v457
        %v482 = vpack.c.b16 %v462, %v460
        %v483 = vpack.c.b16 %v463, %v461
        %v484 = vpack.c.b16 %v466, %v464
        %v485 = vpack.c.b16 %v467, %v465
        %v486 = vpack.c.b16 %v470, %v468
        %v487 = vpack.c.b16 %v471, %v469
        %504 = vmatprep.subr.bf16.mxu0 %v487
        %505 = vmatpush1.bf16.xpose.msra.mxu0 %v486
        %506 = vmatprep.subr.bf16.mxu0 %v485
        %507 = vmatpush1.bf16.xpose.msra.mxu0 %v484
        %508 = vmatprep.subr.bf16.mxu0 %v483
        %509 = vmatpush1.bf16.xpose.msra.mxu0 %v482
        %510 = vmatprep.subr.bf16.mxu0 %v481
        %511 = vmatpush1.bf16.xpose.msra.mxu0 %v480
        %512 = vmatprep.subr.bf16.mxu0 %v479
        %513 = vmatpush1.bf16.xpose.msra.mxu0 %v478
        %514 = vmatprep.subr.bf16.mxu0 %v477
        %515 = vmatpush1.bf16.xpose.msra.mxu0 %v476
        %516 = vmatprep.subr.bf16.mxu0 %v475
        %517 = vmatpush1.bf16.xpose.msra.mxu0 %v474
        %518 = vmatprep.subr.bf16.mxu0 %v473
        %519 = vmatpush1.bf16.xpose.msra.mxu0 %v472
        %520 = vmatprep.subr.bf16.mxu0 0
        %521 = vmatpush2.bf16.xpose.msra.mxu0 0
        %522 = vmatprep.subr.bf16.mxu0 0
        %523 = vmatpush2.bf16.xpose.msra.mxu0 0
        %524 = vmatprep.subr.bf16.mxu0 0
        %525 = vmatpush2.bf16.xpose.msra.mxu0 0
        %526 = vmatprep.subr.bf16.mxu0 0
        %527 = vmatpush2.bf16.xpose.msra.mxu0 0
        %528 = vmatprep.subr.bf16.mxu0 0
        %529 = vmatpush2.bf16.xpose.msra.mxu0 0
        %530 = vmatprep.subr.bf16.mxu0 0
        %531 = vmatpush2.bf16.xpose.msra.mxu0 0
        %532 = vmatprep.subr.bf16.mxu0 0
        %533 = vmatpush2.bf16.xpose.msra.mxu0 0
        %534 = vmatprep.subr.bf16.mxu0 0
        %535 = vmatpush2.bf16.xpose.msra.mxu0 0
        %536 = vmatprep.mubr.bf16.mxu0 %v421
        %537 = vmatmul.mubr.bf16.gmra.mxu0 %v420
        %v538 = vpop.f32.mrf.mxu0
        %v539 = vadd.f32 0.0, %v538
        %v540 = vpop.f32.mrf.mxu0
        %v541 = vpop.f32.mrf.mxu0
        %v542 = vadd.f32 0.0, %v541
        %v543 = vpop.f32.mrf.mxu0
        %544 = vdwg.mxu0
        %v545 = vadd.f32 %v394, %v539
        %v546 = vadd.f32 %v395, %v542
        %547 = vst [vmem:[#allocation2] sm:$0xff] %v545
        %548 = vst [vmem:[#allocation2 + $0x8] sm:$0xff] %v546
        // Predicated region
        $region61: #{tpu_custom_call.1} parent=39 // pred_check
          %p549 = pneg %p381
        $region62: #{tpu_custom_call.1} parent=39 // pred_check_branch
          %551 = sbr.rel (%p549) target = $region64
        $region63: #{tpu_custom_call.1} parent=39 // pred_region
          %v552 = vld [vmem:[#allocation8] sm:$0xf]
          %v553 = vld [vmem:[#allocation8 + $0x4] sm:$0xf]
          %v554 = vld [vmem:[%s335] sm:$0xf]
          %v555 = vld [vmem:[%s335 + $0x4] sm:$0xf]
          %v556 = vld [vmem:[%s335 + $0x8] sm:$0xf]
          %v557 = vld [vmem:[%s335 + $0xc] sm:$0xf]
          %v558 = vld [vmem:[%s335 + $0x10] sm:$0xf]
          %v559 = vld [vmem:[%s335 + $0x14] sm:$0xf]
          %v560 = vld [vmem:[%s335 + $0x18] sm:$0xf]
          %v561 = vld [vmem:[%s335 + $0x1c] sm:$0xf]
          %v562 = vld [vmem:[%s335 + $0x20] sm:$0xf]
          %v563 = vld [vmem:[%s335 + $0x24] sm:$0xf]
          %v564 = vld [vmem:[%s335 + $0x28] sm:$0xf]
          %v565 = vld [vmem:[%s335 + $0x2c] sm:$0xf]
          %v566 = vld [vmem:[%s335 + $0x30] sm:$0xf]
          %v567 = vld [vmem:[%s335 + $0x34] sm:$0xf]
          %v568 = vld [vmem:[%s335 + $0x38] sm:$0xf]
          %v569 = vld [vmem:[%s335 + $0x3c] sm:$0xf]
          %v572 = vunpack.c.l.b16 %v552
          %v573 = vunpack.c.l.b16 %v553
          %v574 = vpack.c.b16 %v573, %v572
          %v592 = vunpack.c.l.b16 %v554
          %v593 = vunpack.c.l.b16 %v555
          %v594 = vunpack.c.l.b16 %v556
          %v595 = vunpack.c.l.b16 %v557
          %v596 = vunpack.c.l.b16 %v558
          %v597 = vunpack.c.l.b16 %v559
          %v598 = vunpack.c.l.b16 %v560
          %v599 = vunpack.c.l.b16 %v561
          %v600 = vunpack.c.l.b16 %v562
          %v601 = vunpack.c.l.b16 %v563
          %v602 = vunpack.c.l.b16 %v564
          %v603 = vunpack.c.l.b16 %v565
          %v604 = vunpack.c.l.b16 %v566
          %v605 = vunpack.c.l.b16 %v567
          %v606 = vunpack.c.l.b16 %v568
          %v607 = vunpack.c.l.b16 %v569
          %v608 = vpack.c.b16 %v593, %v592
          %v609 = vpack.c.b16 %v595, %v594
          %v610 = vpack.c.b16 %v597, %v596
          %v611 = vpack.c.b16 %v599, %v598
          %v612 = vpack.c.b16 %v601, %v600
          %v613 = vpack.c.b16 %v603, %v602
          %v614 = vpack.c.b16 %v605, %v604
          %v615 = vpack.c.b16 %v607, %v606
          %624 = vmatprep.subr.bf16.mxu0 0
          %625 = vmatpush1.bf16.xpose.msra.mxu0 %v615
          %626 = vmatprep.subr.bf16.mxu0 0
          %627 = vmatpush1.bf16.xpose.msra.mxu0 %v614
          %628 = vmatprep.subr.bf16.mxu0 0
          %629 = vmatpush1.bf16.xpose.msra.mxu0 %v613
          %630 = vmatprep.subr.bf16.mxu0 0
          %631 = vmatpush1.bf16.xpose.msra.mxu0 %v612
          %632 = vmatprep.subr.bf16.mxu0 0
          %633 = vmatpush1.bf16.xpose.msra.mxu0 %v611
          %634 = vmatprep.subr.bf16.mxu0 0
          %635 = vmatpush1.bf16.xpose.msra.mxu0 %v610
          %636 = vmatprep.subr.bf16.mxu0 0
          %637 = vmatpush1.bf16.xpose.msra.mxu0 %v609
          %638 = vmatprep.subr.bf16.mxu0 0
          %639 = vmatpush1.bf16.xpose.msra.mxu0 %v608
          %640 = vmatprep.subr.bf16.mxu0 0
          %641 = vmatpush2.bf16.xpose.msra.mxu0 0
          %642 = vmatprep.subr.bf16.mxu0 0
          %643 = vmatpush2.bf16.xpose.msra.mxu0 0
          %644 = vmatprep.subr.bf16.mxu0 0
          %645 = vmatpush2.bf16.xpose.msra.mxu0 0
          %646 = vmatprep.subr.bf16.mxu0 0
          %647 = vmatpush2.bf16.xpose.msra.mxu0 0
          %648 = vmatprep.subr.bf16.mxu0 0
          %649 = vmatpush2.bf16.xpose.msra.mxu0 0
          %650 = vmatprep.subr.bf16.mxu0 0
          %651 = vmatpush2.bf16.xpose.msra.mxu0 0
          %652 = vmatprep.subr.bf16.mxu0 0
          %653 = vmatpush2.bf16.xpose.msra.mxu0 0
          %654 = vmatprep.subr.bf16.mxu0 0
          %655 = vmatpush2.bf16.xpose.msra.mxu0 0
          %656 = vmatprep.mubr.bf16.mxu0 0
          %657 = vmatmul.mubr.bf16.gmra.mxu0 %v574
          %v658 = vpop.f32.mrf.mxu0
          %v659 = vadd.f32 0.0, %v658
          %v660 = vpop.f32.mrf.mxu0
          %v661 = vpop.f32.mrf.mxu0
          %v662 = vadd.f32 0.0, %v661
          %v663 = vpop.f32.mrf.mxu0
          %664 = vdwg.mxu0
          %v665 = vld [vmem:[#allocation2] sm:$0xff]
          %v666 = vld [vmem:[#allocation2 + $0x8] sm:$0xff]
          %v667 = vadd.f32 %v665, %v659
          %v668 = vadd.f32 %v666, %v662
          %669 = vst [vmem:[%s369] sm:$0xff] %v667
          %670 = vst [vmem:[%s369 + $0x8] sm:$0xff] %v668
        $region64: #{tpu_custom_call.1} parent=39 // pred_fallthru
          _
        %s671 = sand.u32 %s189, 1
        %s672 = scalar_lea.sflag [#allocation5], %s671
        %s673 = sand.u32 %s189, 1
        %s674 = smul.addr %s673, 16
        %s675 = scalar_lea.vmem [#allocation11], %s674
        // Predicated region
        $region65: #{tpu_custom_call.1} parent=39 // pred_check
          %p676 = pneg %p199
        $region66: #{tpu_custom_call.1} parent=39 // pred_check_branch
          %678 = sbr.rel (%p676) target = $region68
        $region67: #{tpu_custom_call.1} parent=39 // pred_region
          %s679 = smul.u32 2, %s31
          %s681 = ssub.s32 256, 256
          %682 = vsyncadd %s672, %s681
          %s683 = smul.addr %s679, 3
          %s684 = sadd.s32 %s32, %s683
          %s685 = smul.addr %s684, 128
          %s686 = scalar_lea.hbm %s5, %s685
          %s687 = sshll.u32 %s675, 4
          %s688 = int_to_ptr.vmem [resolvable:$true] %s687
          %693 = dma.vmem_to_hbm [thread:$0]  %s688, 256, %s686, %s672, 128, 384, 8
        $region68: #{tpu_custom_call.1} parent=39 // pred_fallthru
          _
      $region40: #{tpu_custom_call.1} parent=5 // pred_fallthru
        _
      %p694 = scmp.le.s32.totalorder 2, %s21
      // Predicated region
      $region69: #{tpu_custom_call.1} parent=5 // pred_check
        %p695 = pneg %p694
      $region70: #{tpu_custom_call.1} parent=5 // pred_check_branch
        %697 = sbr.rel (%p695) target = $region72
      $region71: #{tpu_custom_call.1} parent=5 // pred_region
        %s698 = ssub.s32 %s21, 2
        // Predicated region
        $region73: #{tpu_custom_call.1} parent=71 // pred_check
          %p699 = pneg %p205
        $region74: #{tpu_custom_call.1} parent=71 // pred_check_branch
          %701 = sbr.rel (%p699) target = $region76
        $region75: #{tpu_custom_call.1} parent=71 // pred_region
          %s702 = sand.u32 %s190, 1
          %s703 = scalar_lea.sflag [#allocation5], %s702
          %s704 = sand.u32 %s190, 1
          %s705 = smul.addr %s704, 16
          %s706 = scalar_lea.vmem [#allocation11], %s705
          %707 = dma.done %s703, 256
        $region76: #{tpu_custom_call.1} parent=71 // pred_fallthru
          _
      $region72: #{tpu_custom_call.1} parent=5 // pred_fallthru
        _
    $region6: #{tpu_custom_call.1} parent=1 // loop_footer
      %s25 = sadd.s32 1, %s21
    $region7: #{tpu_custom_call.1} parent=1 // loop_footer_branch
      %20 = sbr.rel target = $region3
    $region8: #{tpu_custom_call.1} parent=1 // loop_exit
      _
    %708 = vsyncpa [#allocation4], 1
    %s709 = scalar_lea.sflag [#allocation4], 1
    %710 = vsyncpa %s709, 1
    %711 = vsyncpa [#allocation7], 1
    %s712 = scalar_lea.sflag [#allocation7], 1
    %713 = vsyncpa %s712, 1
    %714 = vsyncpa [#allocation10], 1
    %s715 = scalar_lea.sflag [#allocation10], 1
    %716 = vsyncpa %s715, 1
    %717 = vsyncpa [#allocation5], 1
    %s718 = scalar_lea.sflag [#allocation5], 1
    %719 = vsyncpa %s718, 1

</llo_original>
